<compile_context>
chip_gen: v6e
topology: v6e:2x2x1
jax: 0.10.0
libtpu: 0.0.40
codegen_flags: <defaults>
</compile_context>

<pallas_src>
import functools
import math

import jax
import jax.numpy as jnp
from jax.experimental import pallas as pl
from jax.experimental.pallas import tpu as pltpu


def transition_kernel(zu_ref, w_gz_ref, b_gz_ref, w_gh_ref, b_gh_ref,
                      w_ab_ref, w_gs_ref, b_gs_ref, out_ref, *, z_dim):
    """One (rows, block_n) slab of flattened steps, transposed layout y^T = W @ x^T."""
    zu = zu_ref[...]                                             # (z+u, nb)

    # gated hidden path: two MXU matmuls + VPU relu (biases are (rows, 1) columns)
    h1 = jnp.maximum(
        jnp.dot(w_gz_ref[...], zu, preferred_element_type=jnp.float32)
        + b_gz_ref[...], 0.0)                                    # (td, nb)
    h2 = jnp.maximum(
        jnp.dot(w_gh_ref[...], h1, preferred_element_type=jnp.float32)
        + b_gh_ref[...], 0.0)                                    # (td, nb)

    # packed rows: [0, z_dim) -> loc = [Ad|Bd] @ zu^T ; [z_dim, 2z) -> scale pre-act
    packed = (jnp.dot(w_ab_ref[...], zu, preferred_element_type=jnp.float32)
              + jnp.dot(w_gs_ref[...], h2, preferred_element_type=jnp.float32)
              + b_gs_ref[...])                                   # (2z, nb)

    # numerically stable softplus (EUP slot), selected only for the scale rows
    sp = jnp.maximum(packed, 0.0) + jnp.log1p(jnp.exp(-jnp.abs(packed)))
    row = jax.lax.broadcasted_iota(jnp.int32, packed.shape, 0)
    out_ref[...] = jnp.where(row < z_dim, packed, sp)


def transition_forward(z_t, u_t, pp, *, block_n=256):
    """Fused transition. z_t: (..., z_dim), u_t: (..., u_dim) with the same
    leading dims (e.g. (T, B, .) or (B, .)); returns (loc, scale)."""
    lead = z_t.shape[:-1]
    z_dim = z_t.shape[-1]
    u_dim = u_t.shape[-1]
    n = math.prod(lead) if lead else 1

    nb = 128 if n <= 128 else block_n
    assert nb % 128 == 0
    n_pad = pl.cdiv(n, nb) * nb

    # one-time layout plumbing for the whole batch of steps (not per step):
    # concat z/u, pad N to a block multiple, transpose to lane-dense (rows, N).
    zu = jnp.concatenate([z_t.reshape(n, z_dim).astype(jnp.float32),
                          u_t.reshape(n, u_dim).astype(jnp.float32)], axis=1)
    if n_pad != n:
        zu = jnp.pad(zu, ((0, n_pad - n), (0, 0)))
    zu_t = zu.T                                                  # (z+u, n_pad)

    def weight_spec(a):
        # constant block index -> weight stays resident in VMEM across grid steps
        return pl.BlockSpec(a.shape, lambda i: (0, 0))

    out_t = pl.pallas_call(
        functools.partial(transition_kernel, z_dim=z_dim),
        out_shape=jax.ShapeDtypeStruct((2 * z_dim, n_pad), jnp.float32),
        grid=(n_pad // nb,),
        in_specs=[
            pl.BlockSpec((z_dim + u_dim, nb), lambda i: (0, i)),
            weight_spec(pp["w_gz"]), weight_spec(pp["b_gz"]),
            weight_spec(pp["w_gh"]), weight_spec(pp["b_gh"]),
            weight_spec(pp["w_ab"]), weight_spec(pp["w_gs"]),
            weight_spec(pp["b_gs"]),
        ],
        out_specs=pl.BlockSpec((2 * z_dim, nb), lambda i: (0, i)),
        compiler_params=pltpu.CompilerParams(dimension_semantics=("parallel",)),
    )(zu_t, pp["w_gz"], pp["b_gz"], pp["w_gh"], pp["b_gh"],
      pp["w_ab"], pp["w_gs"], pp["b_gs"])

    out = out_t[:, :n].T                                         # (n, 2*z_dim), once
    loc = out[:, :z_dim].reshape(*lead, z_dim)
    scale = out[:, z_dim:].reshape(*lead, z_dim)
    return loc, scale


def init_params(key, z_dim, u_dim, transition_dim):
    """Deterministic synthetic params in PyTorch convention: weight [out, in], bias [out]."""
    ks = jax.random.split(key, 8)

    def unif(k, shape, fan_in):
        bound = 1.0 / jnp.sqrt(fan_in)
        return jax.random.uniform(k, shape, jnp.float32, -bound, bound)

    return {
        # frozen, bias-free linear dynamics
        "Ad": jax.random.normal(ks[0], (z_dim, z_dim), jnp.float32) * 0.5,
        "Bd": jax.random.normal(ks[1], (z_dim, u_dim), jnp.float32) * 0.5,
        # gated hidden path
        "w_gz": unif(ks[2], (transition_dim, z_dim), z_dim),
        "b_gz": unif(ks[3], (transition_dim,), z_dim),
        "w_gh": unif(ks[4], (transition_dim, transition_dim), transition_dim),
        "b_gh": unif(ks[5], (transition_dim,), transition_dim),
        "w_gs": unif(ks[6], (z_dim, transition_dim), transition_dim),
        "b_gs": unif(ks[7], (z_dim,), transition_dim),
    }


def pack_params(p):
    """One-time fusion for the transposed kernel layout:
       * W_gz zero-padded over the u columns so it consumes the packed zu^T input,
       * [Ad | Bd] merged into one weight (loc path = a single matmul),
       * W_gs / b_gs padded into the [loc; scale] row-packed output,
       * biases reshaped to (rows, 1) columns for lane-broadcast adds."""
    z_dim = p["Ad"].shape[0]
    u_dim = p["Bd"].shape[1]
    td = p["w_gz"].shape[0]
    f32 = jnp.float32
    w_gz_pad = jnp.concatenate([p["w_gz"], jnp.zeros((td, u_dim), f32)], axis=1)
    w_ab = jnp.concatenate(
        [jnp.concatenate([p["Ad"], p["Bd"]], axis=1),
         jnp.zeros((z_dim, z_dim + u_dim), f32)], axis=0)
    w_gs_pack = jnp.concatenate([jnp.zeros_like(p["w_gs"]), p["w_gs"]], axis=0)
    b_gs_pack = jnp.concatenate([jnp.zeros((z_dim,), f32), p["b_gs"]], axis=0)
    return {
        "w_gz": w_gz_pad,
        "b_gz": p["b_gz"].reshape(td, 1),
        "w_gh": p["w_gh"],
        "b_gh": p["b_gh"].reshape(td, 1),
        "w_ab": w_ab,
        "w_gs": w_gs_pack,
        "b_gs": b_gs_pack.reshape(2 * z_dim, 1),
    }


if __name__ == "__main__":
    T, B, z_dim, u_dim, transition_dim = 64, 8, 4, 4, 32

    key = jax.random.PRNGKey(0)
    k_z, k_u, k_p = jax.random.split(key, 3)

    z = jax.random.normal(k_z, (T, B, z_dim), jnp.float32)
    u = jax.random.normal(k_u, (T, B, u_dim), jnp.float32)

    params = init_params(k_p, z_dim, u_dim, transition_dim)
    pp = pack_params(params)

    # batched: all T*B steps in one pallas_call
    loc, scale = transition_forward(z, u, pp)
    jax.block_until_ready((loc, scale))

    # pure-JAX reference (unfused PyTorch-convention params), same per-step math
    h1 = jnp.maximum(z @ params["w_gz"].T + params["b_gz"], 0.0)
    h2 = jnp.maximum(h1 @ params["w_gh"].T + params["b_gh"], 0.0)
    loc_ref = z @ params["Ad"].T + u @ params["Bd"].T
    scale_ref = jax.nn.softplus(h2 @ params["w_gs"].T + params["b_gs"])

    assert loc.shape == (T, B, z_dim) and scale.shape == (T, B, z_dim)
    assert jnp.allclose(loc, loc_ref, atol=1e-4, rtol=1e-4), "loc mismatch"
    assert jnp.allclose(scale, scale_ref, atol=1e-4, rtol=1e-4), "scale mismatch"

    # single-step path (original module forward signature: (B, z_dim), (B, u_dim))
    loc1, scale1 = transition_forward(z[0], u[0], pp)
    jax.block_until_ready((loc1, scale1))
    assert jnp.allclose(loc1, loc_ref[0], atol=1e-4, rtol=1e-4), "single-step loc mismatch"
    assert jnp.allclose(scale1, scale_ref[0], atol=1e-4, rtol=1e-4), "single-step scale mismatch"

    print("KERNEL_OK")
</pallas_src>

<mosaic_0001>
module attributes {stable_mosaic.version = 11 : i64} {
  func.func @transition_kernel(%arg0: i32, %arg1: memref<8x256xf32, #tpu.memory_space<vmem>>, %arg2: memref<32x8xf32, #tpu.memory_space<vmem>>, %arg3: memref<32x1xf32, #tpu.memory_space<vmem>>, %arg4: memref<32x32xf32, #tpu.memory_space<vmem>>, %arg5: memref<32x1xf32, #tpu.memory_space<vmem>>, %arg6: memref<8x8xf32, #tpu.memory_space<vmem>>, %arg7: memref<8x32xf32, #tpu.memory_space<vmem>>, %arg8: memref<8x1xf32, #tpu.memory_space<vmem>>, %arg9: memref<8x256xf32, #tpu.memory_space<vmem>>) attributes {dimension_semantics = [#tpu.dimension_semantics<parallel>], iteration_bounds = array<i64: 2>, scalar_prefetch = 0 : i64, scratch_operands = 0 : i64, tpu.core_type = #tpu.core_type<tc>, window_params = [{transform_indices = @transform_0, window_bounds = array<i64: 8, 256>}, {pipeline_mode = #tpu.pipeline_mode<synchronous>, transform_indices = @transform_1, window_bounds = array<i64: 32, 8>}, {pipeline_mode = #tpu.pipeline_mode<synchronous>, transform_indices = @transform_2, window_bounds = array<i64: 32, 1>}, {pipeline_mode = #tpu.pipeline_mode<synchronous>, transform_indices = @transform_3, window_bounds = array<i64: 32, 32>}, {pipeline_mode = #tpu.pipeline_mode<synchronous>, transform_indices = @transform_4, window_bounds = array<i64: 32, 1>}, {pipeline_mode = #tpu.pipeline_mode<synchronous>, transform_indices = @transform_5, window_bounds = array<i64: 8, 8>}, {pipeline_mode = #tpu.pipeline_mode<synchronous>, transform_indices = @transform_6, window_bounds = array<i64: 8, 32>}, {pipeline_mode = #tpu.pipeline_mode<synchronous>, transform_indices = @transform_7, window_bounds = array<i64: 8, 1>}, {transform_indices = @transform_8, window_bounds = array<i64: 8, 256>}]} {
    %c0 = arith.constant 0 : index
    %c0_0 = arith.constant 0 : index
    %0 = vector.load %arg1[%c0, %c0_0] : memref<8x256xf32, #tpu.memory_space<vmem>>, vector<8x256xf32>
    %c0_1 = arith.constant 0 : index
    %c0_2 = arith.constant 0 : index
    %1 = vector.load %arg2[%c0_1, %c0_2] : memref<32x8xf32, #tpu.memory_space<vmem>>, vector<32x8xf32>
    %cst = arith.constant dense<0.000000e+00> : vector<32x256xf32>
    %2 = tpu.matmul %1, %0, %cst {dimension_numbers = #tpu.dot_dimension_numbers<[1], [0], [0], [1], [0, 0, 1, 1], [], []>} : vector<32x8xf32>, vector<8x256xf32>, vector<32x256xf32> -> vector<32x256xf32>
    %c0_3 = arith.constant 0 : index
    %c0_4 = arith.constant 0 : index
    %3 = vector.load %arg3[%c0_3, %c0_4] : memref<32x1xf32, #tpu.memory_space<vmem>>, vector<32x1xf32>
    %4 = vector.broadcast %3 : vector<32x1xf32> to vector<32x256xf32>
    %5 = arith.addf %2, %4 : vector<32x256xf32>
    %cst_5 = arith.constant 0.000000e+00 : f32
    %6 = vector.broadcast %cst_5 : f32 to vector<32x256xf32>
    %7 = arith.maximumf %5, %6 : vector<32x256xf32>
    %c0_6 = arith.constant 0 : index
    %c0_7 = arith.constant 0 : index
    %8 = vector.load %arg4[%c0_6, %c0_7] : memref<32x32xf32, #tpu.memory_space<vmem>>, vector<32x32xf32>
    %cst_8 = arith.constant dense<0.000000e+00> : vector<32x256xf32>
    %9 = tpu.matmul %8, %7, %cst_8 {dimension_numbers = #tpu.dot_dimension_numbers<[1], [0], [0], [1], [0, 0, 1, 1], [], []>} : vector<32x32xf32>, vector<32x256xf32>, vector<32x256xf32> -> vector<32x256xf32>
    %c0_9 = arith.constant 0 : index
    %c0_10 = arith.constant 0 : index
    %10 = vector.load %arg5[%c0_9, %c0_10] : memref<32x1xf32, #tpu.memory_space<vmem>>, vector<32x1xf32>
    %11 = vector.broadcast %10 : vector<32x1xf32> to vector<32x256xf32>
    %12 = arith.addf %9, %11 : vector<32x256xf32>
    %cst_11 = arith.constant 0.000000e+00 : f32
    %13 = vector.broadcast %cst_11 : f32 to vector<32x256xf32>
    %14 = arith.maximumf %12, %13 : vector<32x256xf32>
    %c0_12 = arith.constant 0 : index
    %c0_13 = arith.constant 0 : index
    %15 = vector.load %arg6[%c0_12, %c0_13] : memref<8x8xf32, #tpu.memory_space<vmem>>, vector<8x8xf32>
    %cst_14 = arith.constant dense<0.000000e+00> : vector<8x256xf32>
    %16 = tpu.matmul %15, %0, %cst_14 {dimension_numbers = #tpu.dot_dimension_numbers<[1], [0], [0], [1], [0, 0, 1, 1], [], []>} : vector<8x8xf32>, vector<8x256xf32>, vector<8x256xf32> -> vector<8x256xf32>
    %c0_15 = arith.constant 0 : index
    %c0_16 = arith.constant 0 : index
    %17 = vector.load %arg7[%c0_15, %c0_16] : memref<8x32xf32, #tpu.memory_space<vmem>>, vector<8x32xf32>
    %cst_17 = arith.constant dense<0.000000e+00> : vector<8x256xf32>
    %18 = tpu.matmul %17, %14, %cst_17 {dimension_numbers = #tpu.dot_dimension_numbers<[1], [0], [0], [1], [0, 0, 1, 1], [], []>} : vector<8x32xf32>, vector<32x256xf32>, vector<8x256xf32> -> vector<8x256xf32>
    %19 = arith.addf %16, %18 : vector<8x256xf32>
    %c0_18 = arith.constant 0 : index
    %c0_19 = arith.constant 0 : index
    %20 = vector.load %arg8[%c0_18, %c0_19] : memref<8x1xf32, #tpu.memory_space<vmem>>, vector<8x1xf32>
    %21 = vector.broadcast %20 : vector<8x1xf32> to vector<8x256xf32>
    %22 = arith.addf %19, %21 : vector<8x256xf32>
    %cst_20 = arith.constant 0.000000e+00 : f32
    %23 = vector.broadcast %cst_20 : f32 to vector<8x256xf32>
    %24 = arith.maximumf %22, %23 : vector<8x256xf32>
    %25 = math.absf %22 : vector<8x256xf32>
    %cst_21 = arith.constant 0.000000e+00 : f32
    %26 = vector.broadcast %cst_21 : f32 to vector<8x256xf32>
    %27 = arith.subf %26, %25 : vector<8x256xf32>
    %28 = math.exp %27 : vector<8x256xf32>
    %29 = math.log1p %28 : vector<8x256xf32>
    %30 = arith.addf %24, %29 : vector<8x256xf32>
    %31 = tpu.iota {dimensions = array<i32: 0>} : vector<8x256xi32>
    %c4_i32 = arith.constant 4 : i32
    %32 = vector.broadcast %c4_i32 : i32 to vector<8x256xi32>
    %33 = arith.cmpi slt, %31, %32 : vector<8x256xi32>
    %34 = arith.select %33, %22, %30 : vector<8x256xi1>, vector<8x256xf32>
    %c0_22 = arith.constant 0 : index
    %c0_23 = arith.constant 0 : index
    %35 = vector.load %arg9[%c0_22, %c0_23] : memref<8x256xf32, #tpu.memory_space<vmem>>, vector<8x256xf32>
    tpu.vector_store %arg9[%c0_22, %c0_23], %34 {strides = array<i32>} : memref<8x256xf32, #tpu.memory_space<vmem>>, vector<8x256xf32>,
    return
  }
  func.func @transform_0(%arg0: i32) -> (i32, i32) {
    %c0_i32 = arith.constant 0 : i32
    %c0_i32_0 = arith.constant 0 : i32
    return %c0_i32, %arg0 : i32, i32
  }
  func.func @transform_1(%arg0: i32) -> (i32, i32) {
    %c0_i32 = arith.constant 0 : i32
    %c0_i32_0 = arith.constant 0 : i32
    %c0_i32_1 = arith.constant 0 : i32
    return %c0_i32, %c0_i32_0 : i32, i32
  }
  func.func @transform_2(%arg0: i32) -> (i32, i32) {
    %c0_i32 = arith.constant 0 : i32
    %c0_i32_0 = arith.constant 0 : i32
    %c0_i32_1 = arith.constant 0 : i32
    return %c0_i32, %c0_i32_0 : i32, i32
  }
  func.func @transform_3(%arg0: i32) -> (i32, i32) {
    %c0_i32 = arith.constant 0 : i32
    %c0_i32_0 = arith.constant 0 : i32
    %c0_i32_1 = arith.constant 0 : i32
    return %c0_i32, %c0_i32_0 : i32, i32
  }
  func.func @transform_4(%arg0: i32) -> (i32, i32) {
    %c0_i32 = arith.constant 0 : i32
    %c0_i32_0 = arith.constant 0 : i32
    %c0_i32_1 = arith.constant 0 : i32
    return %c0_i32, %c0_i32_0 : i32, i32
  }
  func.func @transform_5(%arg0: i32) -> (i32, i32) {
    %c0_i32 = arith.constant 0 : i32
    %c0_i32_0 = arith.constant 0 : i32
    %c0_i32_1 = arith.constant 0 : i32
    return %c0_i32, %c0_i32_0 : i32, i32
  }
  func.func @transform_6(%arg0: i32) -> (i32, i32) {
    %c0_i32 = arith.constant 0 : i32
    %c0_i32_0 = arith.constant 0 : i32
    %c0_i32_1 = arith.constant 0 : i32
    return %c0_i32, %c0_i32_0 : i32, i32
  }
  func.func @transform_7(%arg0: i32) -> (i32, i32) {
    %c0_i32 = arith.constant 0 : i32
    %c0_i32_0 = arith.constant 0 : i32
    %c0_i32_1 = arith.constant 0 : i32
    return %c0_i32, %c0_i32_0 : i32, i32
  }
  func.func @transform_8(%arg0: i32) -> (i32, i32) {
    %c0_i32 = arith.constant 0 : i32
    %c0_i32_0 = arith.constant 0 : i32
    return %c0_i32, %arg0 : i32, i32
  }
}

</mosaic_0001>

<llo_original>
// kernel: tpu_custom_call.1
$region0: #{tpu_custom_call.1}
  #allocation0 [shape = 'u32[]', space=smem, size = 0x4, offset = 0x4, fixed_abs, tag = 'smem constant byte address 0x4 - core index']
  #allocation1 [shape = 'u32[144,128]{1,0:T(1,128)}', space=vmem, size = 0x12000, scoped, tag = 'internal scratch']
  %s0 = inlined_call_operand.vmem [shape: f32[8,512], index: 0, kind: input, shape index: {}]
  %s1 = inlined_call_operand.vmem [shape: f32[32,8], index: 1, kind: input, shape index: {}]
  %s2 = inlined_call_operand.vmem [shape: f32[32,1], index: 2, kind: input, shape index: {}]
  %s3 = inlined_call_operand.vmem [shape: f32[32,32], index: 3, kind: input, shape index: {}]
  %s4 = inlined_call_operand.vmem [shape: f32[32,1], index: 4, kind: input, shape index: {}]
  %s5 = inlined_call_operand.vmem [shape: f32[8,8], index: 5, kind: input, shape index: {}]
  %s6 = inlined_call_operand.vmem [shape: f32[8,32], index: 6, kind: input, shape index: {}]
  %s7 = inlined_call_operand.vmem [shape: f32[8,1], index: 7, kind: input, shape index: {}]
  %s8 = inlined_call_operand.hbm [shape: f32[8,512], index: 8, kind: output, shape index: {}]
  %s9 = sld [smem:[#allocation0]]
  $region65: #{tpu_custom_call.1} parent=0
    _
  %s11 = ssub.s32 1, %s9
  %s12 = scalar_select 0, %s11, %s9
  $region1: #{tpu_custom_call.1} parent=0
    #allocation2 [shape = 'u8[16384]{0}', space=vmem, size = 0x4000, scoped, tag = 'output window, operand 0']
    #allocation3 [shape = 's32[2]{0}', space=sflag, size = 0x8, scoped, tag = 'scoped memory for tpu_custom_call.1']
    %13 = vsyncpa [#allocation3], 0
    %s14 = scalar_lea.sflag [#allocation3], 1
    %15 = vsyncpa %s14, 0
    loop: start=0, step=1, limit=4
    $region2: #{tpu_custom_call.1} parent=1 // loop_pre_header
      _
    $region3: #{tpu_custom_call.1} parent=1 // loop_header
      %s17 = sphi 0, %s21
      %p18 = scmp.ge.s32.totalorder %s17, 4
      %s27 = sphi 0, %s29
      %s30 = sphi 0, %s27
      %s31 = sphi 0, %s30
      %s47 = sphi 0, %s31
      %s51 = sphi 0, %s51
      %s53 = sphi 0, %s51
      %s54 = sphi 0, %s53
      %s68 = sphi 0, %s54
      %s72 = sphi 0, %s72
      %s74 = sphi 0, %s72
      %s75 = sphi 0, %s74
      %s89 = sphi 0, %s75
      %s93 = sphi 0, %s93
      %s95 = sphi 0, %s93
      %s96 = sphi 0, %s95
      %s110 = sphi 0, %s96
      %s114 = sphi 0, %s114
      %s116 = sphi 0, %s114
      %s117 = sphi 0, %s116
      %s131 = sphi 0, %s117
      %s135 = sphi 0, %s135
      %s137 = sphi 0, %s135
      %s138 = sphi 0, %s137
      %s152 = sphi 0, %s138
      %s156 = sphi 0, %s156
      %s158 = sphi 0, %s156
      %s159 = sphi 0, %s158
      %s173 = sphi 0, %s159
      %s177 = sphi 0, %s177
      %s179 = sphi 0, %s177
      %s180 = sphi 0, %s179
      %s194 = sphi 0, %s180
      %s200 = sphi 0, %s202
      %s203 = sphi 0, %s200
      %s204 = sphi 0, %s203
      %s220 = sphi 0, %s204
    $region4: #{tpu_custom_call.1} parent=1 // loop_header_branch
      %20 = sbr.rel (%p18) target = $region8
    $region5: #{tpu_custom_call.1} parent=1 // loop_body
      %s22 = ssub.s32 %s17, 1
      %s23 = ssub.s32 %s17, 2
      %s24 = sadd.s32 %s17, 1
      %s25 = ssub.s32 %s17, %s24
      %p26 = scmp.eq.s32.totalorder %s25, 0
      %s28 = sadd.s32 %s27, 1
      %s29 = scalar_select %p26, %s27, %s28
      %p32 = pneg %p26
      %p33 = scmp.eq.s32.totalorder %s17, 1
      %p34 = por %p32, %p33
      %p35 = scmp.ne.s32.totalorder %s27, %s30
      %p36 = scmp.eq.s32.totalorder %s17, 0
      %p37 = por %p35, %p36
      %p38 = scmp.ne.s32.totalorder %s27, %s30
      %p39 = scmp.eq.s32.totalorder %s22, 1
      %p40 = por %p38, %p39
      %p41 = scmp.ne.s32.totalorder %s30, %s31
      %p42 = scmp.eq.s32.totalorder %s22, 0
      %p43 = por %p41, %p42
      %p44 = scmp.ne.s32.totalorder %s30, %s31
      %p45 = scmp.eq.s32.totalorder %s23, 1
      %p46 = por %p44, %p45
      %p48 = scmp.ne.s32.totalorder %s31, %s47
      %p49 = scmp.eq.s32.totalorder %s23, 0
      %p50 = por %p48, %p49
      %s52 = sadd.s32 %s51, 1
      %p55 = scmp.eq.s32.totalorder %s17, 1
      %p56 = scmp.ne.s32.totalorder %s51, %s53
      %p57 = scmp.eq.s32.totalorder %s17, 0
      %p58 = por %p56, %p57
      %p59 = scmp.ne.s32.totalorder %s51, %s53
      %p60 = scmp.eq.s32.totalorder %s22, 1
      %p61 = por %p59, %p60
      %p62 = scmp.ne.s32.totalorder %s53, %s54
      %p63 = scmp.eq.s32.totalorder %s22, 0
      %p64 = por %p62, %p63
      %p65 = scmp.ne.s32.totalorder %s53, %s54
      %p66 = scmp.eq.s32.totalorder %s23, 1
      %p67 = por %p65, %p66
      %p69 = scmp.ne.s32.totalorder %s54, %s68
      %p70 = scmp.eq.s32.totalorder %s23, 0
      %p71 = por %p69, %p70
      %s73 = sadd.s32 %s72, 1
      %p76 = scmp.eq.s32.totalorder %s17, 1
      %p77 = scmp.ne.s32.totalorder %s72, %s74
      %p78 = scmp.eq.s32.totalorder %s17, 0
      %p79 = por %p77, %p78
      %p80 = scmp.ne.s32.totalorder %s72, %s74
      %p81 = scmp.eq.s32.totalorder %s22, 1
      %p82 = por %p80, %p81
      %p83 = scmp.ne.s32.totalorder %s74, %s75
      %p84 = scmp.eq.s32.totalorder %s22, 0
      %p85 = por %p83, %p84
      %p86 = scmp.ne.s32.totalorder %s74, %s75
      %p87 = scmp.eq.s32.totalorder %s23, 1
      %p88 = por %p86, %p87
      %p90 = scmp.ne.s32.totalorder %s75, %s89
      %p91 = scmp.eq.s32.totalorder %s23, 0
      %p92 = por %p90, %p91
      %s94 = sadd.s32 %s93, 1
      %p97 = scmp.eq.s32.totalorder %s17, 1
      %p98 = scmp.ne.s32.totalorder %s93, %s95
      %p99 = scmp.eq.s32.totalorder %s17, 0
      %p100 = por %p98, %p99
      %p101 = scmp.ne.s32.totalorder %s93, %s95
      %p102 = scmp.eq.s32.totalorder %s22, 1
      %p103 = por %p101, %p102
      %p104 = scmp.ne.s32.totalorder %s95, %s96
      %p105 = scmp.eq.s32.totalorder %s22, 0
      %p106 = por %p104, %p105
      %p107 = scmp.ne.s32.totalorder %s95, %s96
      %p108 = scmp.eq.s32.totalorder %s23, 1
      %p109 = por %p107, %p108
      %p111 = scmp.ne.s32.totalorder %s96, %s110
      %p112 = scmp.eq.s32.totalorder %s23, 0
      %p113 = por %p111, %p112
      %s115 = sadd.s32 %s114, 1
      %p118 = scmp.eq.s32.totalorder %s17, 1
      %p119 = scmp.ne.s32.totalorder %s114, %s116
      %p120 = scmp.eq.s32.totalorder %s17, 0
      %p121 = por %p119, %p120
      %p122 = scmp.ne.s32.totalorder %s114, %s116
      %p123 = scmp.eq.s32.totalorder %s22, 1
      %p124 = por %p122, %p123
      %p125 = scmp.ne.s32.totalorder %s116, %s117
      %p126 = scmp.eq.s32.totalorder %s22, 0
      %p127 = por %p125, %p126
      %p128 = scmp.ne.s32.totalorder %s116, %s117
      %p129 = scmp.eq.s32.totalorder %s23, 1
      %p130 = por %p128, %p129
      %p132 = scmp.ne.s32.totalorder %s117, %s131
      %p133 = scmp.eq.s32.totalorder %s23, 0
      %p134 = por %p132, %p133
      %s136 = sadd.s32 %s135, 1
      %p139 = scmp.eq.s32.totalorder %s17, 1
      %p140 = scmp.ne.s32.totalorder %s135, %s137
      %p141 = scmp.eq.s32.totalorder %s17, 0
      %p142 = por %p140, %p141
      %p143 = scmp.ne.s32.totalorder %s135, %s137
      %p144 = scmp.eq.s32.totalorder %s22, 1
      %p145 = por %p143, %p144
      %p146 = scmp.ne.s32.totalorder %s137, %s138
      %p147 = scmp.eq.s32.totalorder %s22, 0
      %p148 = por %p146, %p147
      %p149 = scmp.ne.s32.totalorder %s137, %s138
      %p150 = scmp.eq.s32.totalorder %s23, 1
      %p151 = por %p149, %p150
      %p153 = scmp.ne.s32.totalorder %s138, %s152
      %p154 = scmp.eq.s32.totalorder %s23, 0
      %p155 = por %p153, %p154
      %s157 = sadd.s32 %s156, 1
      %p160 = scmp.eq.s32.totalorder %s17, 1
      %p161 = scmp.ne.s32.totalorder %s156, %s158
      %p162 = scmp.eq.s32.totalorder %s17, 0
      %p163 = por %p161, %p162
      %p164 = scmp.ne.s32.totalorder %s156, %s158
      %p165 = scmp.eq.s32.totalorder %s22, 1
      %p166 = por %p164, %p165
      %p167 = scmp.ne.s32.totalorder %s158, %s159
      %p168 = scmp.eq.s32.totalorder %s22, 0
      %p169 = por %p167, %p168
      %p170 = scmp.ne.s32.totalorder %s158, %s159
      %p171 = scmp.eq.s32.totalorder %s23, 1
      %p172 = por %p170, %p171
      %p174 = scmp.ne.s32.totalorder %s159, %s173
      %p175 = scmp.eq.s32.totalorder %s23, 0
      %p176 = por %p174, %p175
      %s178 = sadd.s32 %s177, 1
      %p181 = scmp.eq.s32.totalorder %s17, 1
      %p182 = scmp.ne.s32.totalorder %s177, %s179
      %p183 = scmp.eq.s32.totalorder %s17, 0
      %p184 = por %p182, %p183
      %p185 = scmp.ne.s32.totalorder %s177, %s179
      %p186 = scmp.eq.s32.totalorder %s22, 1
      %p187 = por %p185, %p186
      %p188 = scmp.ne.s32.totalorder %s179, %s180
      %p189 = scmp.eq.s32.totalorder %s22, 0
      %p190 = por %p188, %p189
      %p191 = scmp.ne.s32.totalorder %s179, %s180
      %p192 = scmp.eq.s32.totalorder %s23, 1
      %p193 = por %p191, %p192
      %p195 = scmp.ne.s32.totalorder %s180, %s194
      %p196 = scmp.eq.s32.totalorder %s23, 0
      %p197 = por %p195, %p196
      %s198 = ssub.s32 %s17, %s24
      %p199 = scmp.eq.s32.totalorder %s198, 0
      %s201 = sadd.s32 %s200, 1
      %s202 = scalar_select %p199, %s200, %s201
      %p205 = pneg %p199
      %p206 = scmp.eq.s32.totalorder %s17, 1
      %p207 = por %p205, %p206
      %p208 = scmp.ne.s32.totalorder %s200, %s203
      %p209 = scmp.eq.s32.totalorder %s17, 0
      %p210 = por %p208, %p209
      %p211 = scmp.ne.s32.totalorder %s200, %s203
      %p212 = scmp.eq.s32.totalorder %s22, 1
      %p213 = por %p211, %p212
      %p214 = scmp.ne.s32.totalorder %s203, %s204
      %p215 = scmp.eq.s32.totalorder %s22, 0
      %p216 = por %p214, %p215
      %p217 = scmp.ne.s32.totalorder %s203, %s204
      %p218 = scmp.eq.s32.totalorder %s23, 1
      %p219 = por %p217, %p218
      %p221 = scmp.ne.s32.totalorder %s204, %s220
      %p222 = scmp.eq.s32.totalorder %s23, 0
      %p223 = por %p221, %p222
      %p224 = scmp.le.s32.totalorder 1, %s17
      %p225 = scmp.lt.s32.totalorder %s17, 3
      %p226 = pnand %p224, %p225
      %p227 = pneg %p226
      // Predicated region
      $region9: #{tpu_custom_call.1} parent=5 // pred_check
        _
      $region10: #{tpu_custom_call.1} parent=5 // pred_check_branch
        %229 = sbr.rel (%p226) target = $region12
      $region11: #{tpu_custom_call.1} parent=5 // pred_region
        %s230 = ssub.s32 %s17, 1
        // Predicated region
        $region13: #{tpu_custom_call.1} parent=11 // pred_check
          %p231 = pneg %p64
        $region14: #{tpu_custom_call.1} parent=11 // pred_check_branch
          %233 = sbr.rel (%p231) target = $region16
        $region15: #{tpu_custom_call.1} parent=11 // pred_region
          _
        $region16: #{tpu_custom_call.1} parent=11 // pred_fallthru
          _
        // Predicated region
        $region17: #{tpu_custom_call.1} parent=11 // pred_check
          %p234 = pneg %p85
        $region18: #{tpu_custom_call.1} parent=11 // pred_check_branch
          %236 = sbr.rel (%p234) target = $region20
        $region19: #{tpu_custom_call.1} parent=11 // pred_region
          _
        $region20: #{tpu_custom_call.1} parent=11 // pred_fallthru
          _
        // Predicated region
        $region21: #{tpu_custom_call.1} parent=11 // pred_check
          %p237 = pneg %p106
        $region22: #{tpu_custom_call.1} parent=11 // pred_check_branch
          %239 = sbr.rel (%p237) target = $region24
        $region23: #{tpu_custom_call.1} parent=11 // pred_region
          _
        $region24: #{tpu_custom_call.1} parent=11 // pred_fallthru
          _
        // Predicated region
        $region25: #{tpu_custom_call.1} parent=11 // pred_check
          %p240 = pneg %p127
        $region26: #{tpu_custom_call.1} parent=11 // pred_check_branch
          %242 = sbr.rel (%p240) target = $region28
        $region27: #{tpu_custom_call.1} parent=11 // pred_region
          _
        $region28: #{tpu_custom_call.1} parent=11 // pred_fallthru
          _
        // Predicated region
        $region29: #{tpu_custom_call.1} parent=11 // pred_check
          %p243 = pneg %p148
        $region30: #{tpu_custom_call.1} parent=11 // pred_check_branch
          %245 = sbr.rel (%p243) target = $region32
        $region31: #{tpu_custom_call.1} parent=11 // pred_region
          _
        $region32: #{tpu_custom_call.1} parent=11 // pred_fallthru
          _
        // Predicated region
        $region33: #{tpu_custom_call.1} parent=11 // pred_check
          %p246 = pneg %p169
        $region34: #{tpu_custom_call.1} parent=11 // pred_check_branch
          %248 = sbr.rel (%p246) target = $region36
        $region35: #{tpu_custom_call.1} parent=11 // pred_region
          _
        $region36: #{tpu_custom_call.1} parent=11 // pred_fallthru
          _
        // Predicated region
        $region37: #{tpu_custom_call.1} parent=11 // pred_check
          %p249 = pneg %p190
        $region38: #{tpu_custom_call.1} parent=11 // pred_check_branch
          %251 = sbr.rel (%p249) target = $region40
        $region39: #{tpu_custom_call.1} parent=11 // pred_region
          _
        $region40: #{tpu_custom_call.1} parent=11 // pred_fallthru
          _
      $region12: #{tpu_custom_call.1} parent=5 // pred_fallthru
        _
      %p252 = scmp.lt.s32.totalorder %s17, 2
      // Predicated region
      $region41: #{tpu_custom_call.1} parent=5 // pred_check
        %p253 = pneg %p252
      $region42: #{tpu_custom_call.1} parent=5 // pred_check_branch
        %255 = sbr.rel (%p253) target = $region44
      $region43: #{tpu_custom_call.1} parent=5 // pred_region
        // Predicated region
        $region45: #{tpu_custom_call.1} parent=43 // pred_check
          %p256 = pneg %p37
        $region46: #{tpu_custom_call.1} parent=43 // pred_check_branch
          %258 = sbr.rel (%p256) target = $region48
        $region47: #{tpu_custom_call.1} parent=43 // pred_region
          %s259 = smul.u32 2, %s17
          %p260 = scmp.lt.s32.totalorder %s259, 3
          %s261 = scalar_select %p260, %s259, 3
          %s262 = smul.addr %s261, 8
          %s263 = scalar_lea.vmem %s0, %s262
          %s264 = smul.u32 2, %s17
        $region48: #{tpu_custom_call.1} parent=43 // pred_fallthru
          _
      $region44: #{tpu_custom_call.1} parent=5 // pred_fallthru
        _
      %p265 = scmp.le.s32.totalorder 1, %s17
      %p266 = scmp.lt.s32.totalorder %s17, 3
      %p267 = pnand %p265, %p266
      %p268 = pneg %p267
      // Predicated region
      $region49: #{tpu_custom_call.1} parent=5 // pred_check
        _
      $region50: #{tpu_custom_call.1} parent=5 // pred_check_branch
        %270 = sbr.rel (%p267) target = $region52
      $region51: #{tpu_custom_call.1} parent=5 // pred_region
        %s271 = ssub.s32 %s17, 1
        %s272 = smul.u32 2, %s22
        %p273 = scmp.lt.s32.totalorder %s272, 3
        %s274 = scalar_select %p273, %s272, 3
        %s275 = smul.addr %s274, 8
        %s276 = scalar_lea.vmem %s0, %s275
        %p277 = pneg %p43
        %p278 = pneg %p40
        %p279 = pneg %p64
        %p280 = pneg %p61
        %p281 = pneg %p85
        %p282 = pneg %p82
        %p283 = pneg %p106
        %p284 = pneg %p103
        %p285 = pneg %p127
        %p286 = pneg %p124
        %p287 = pneg %p148
        %p288 = pneg %p145
        %p289 = pneg %p169
        %p290 = pneg %p166
        %p291 = pneg %p190
        %p292 = pneg %p187
        %p293 = pneg %p216
        %p294 = pneg %p213
        %s295 = sand.u32 %s203, 1
        %s296 = scalar_lea.sflag [#allocation3], %s295
        %s297 = sand.u32 %s203, 1
        %s298 = smul.addr %s297, 16
        %s299 = scalar_lea.vmem [#allocation2], %s298
        %s300 = smul.u32 2, %s22
        %p301 = scmp.lt.s32.totalorder %s300, 3
        %s302 = scalar_select %p301, %s300, 3
        %s303 = smul.addr %s302, 8
        %s304 = scalar_lea.vmem %s0, %s303
        %s305 = smul.u32 2, %s22
        %s306 = smul.u32 2, %s22
        %v307 = vld [vmem:[%s304] sm:$0xff]
        %v308 = vld [vmem:[%s304 + $0x8] sm:$0xff]
        %v309 = vld [vmem:[%s1] sm:$0xff]
        %v310 = vld [vmem:[%s1 + $0x8] sm:$0xff]
        %v311 = vld [vmem:[%s1 + $0x10] sm:$0xff]
        %v312 = vld [vmem:[%s1 + $0x18] sm:$0xff]
        %v313 = vld [vmem:[%s2] sm:$0xff]
        %v314 = vld [vmem:[%s2 + $0x8] sm:$0xff]
        %v315 = vld [vmem:[%s2 + $0x10] sm:$0xff]
        %v316 = vld [vmem:[%s2 + $0x18] sm:$0xff]
        %318 = vset.pattern.permute.xlu0 0
        %319 = vperm.xlu0 %318, %v313
        %v320 = vpop.permute.xlu0 %319
        %323 = vset.pattern.permute.xlu0 0
        %324 = vperm.xlu0 %323, %v314
        %v325 = vpop.permute.xlu0 %324
        %328 = vset.pattern.permute.xlu0 0
        %329 = vperm.xlu0 %328, %v315
        %v330 = vpop.permute.xlu0 %329
        %333 = vset.pattern.permute.xlu0 0
        %334 = vperm.xlu0 %333, %v316
        %v335 = vpop.permute.xlu0 %334
        %vm337 = vcmask 64512
        %v339 = vsel %vm337, %v309, 0
        %v342 = vsel %vm337, %v310, 0
        %v345 = vsel %vm337, %v311, 0
        %v348 = vsel %vm337, %v312, 0
        %350 = vmatprep.subr.mxu0 0.0
        %351 = vmatpush1.msra.mxu0 0.0
        %352 = vmatprep.subr.mxu0 0.0
        %353 = vmatpush1.msra.mxu0 0.0
        %354 = vmatprep.subr.mxu0 0.0
        %355 = vmatpush1.msra.mxu0 0.0
        %356 = vmatprep.subr.mxu0 0.0
        %357 = vmatpush1.msra.mxu0 0.0
        %358 = vmatprep.subr.mxu0 0.0
        %359 = vmatpush1.msra.mxu0 0.0
        %360 = vmatprep.subr.mxu0 0.0
        %361 = vmatpush1.msra.mxu0 0.0
        %362 = vmatprep.subr.mxu0 0.0
        %363 = vmatpush1.msra.mxu0 0.0
        %364 = vmatprep.subr.mxu0 0.0
        %365 = vmatpush1.msra.mxu0 0.0
        %366 = vmatprep.subr.mxu0 0.0
        %367 = vmatpush1.msra.mxu0 0.0
        %368 = vmatprep.subr.mxu0 0.0
        %369 = vmatpush1.msra.mxu0 0.0
        %370 = vmatprep.subr.mxu0 0.0
        %371 = vmatpush1.msra.mxu0 0.0
        %372 = vmatprep.subr.mxu0 0.0
        %373 = vmatpush1.msra.mxu0 0.0
        %374 = vmatprep.subr.mxu0 0.0
        %375 = vmatpush1.msra.mxu0 0.0
        %376 = vmatprep.subr.mxu0 0.0
        %377 = vmatpush1.msra.mxu0 0.0
        %378 = vmatprep.subr.mxu0 0.0
        %379 = vmatpush1.msra.mxu0 0.0
        %380 = vmatprep.subr.mxu0 %v308
        %381 = vmatpush1.msra.mxu0 %v307
        %382 = vmatprep.subr.mxu0 0.0
        %383 = vmatpush2.msra.mxu0 0.0
        %384 = vmatprep.subr.mxu0 0.0
        %385 = vmatpush2.msra.mxu0 0.0
        %386 = vmatprep.subr.mxu0 0.0
        %387 = vmatpush2.msra.mxu0 0.0
        %388 = vmatprep.subr.mxu0 0.0
        %389 = vmatpush2.msra.mxu0 0.0
        %390 = vmatprep.subr.mxu0 0.0
        %391 = vmatpush2.msra.mxu0 0.0
        %392 = vmatprep.subr.mxu0 0.0
        %393 = vmatpush2.msra.mxu0 0.0
        %394 = vmatprep.subr.mxu0 0.0
        %395 = vmatpush2.msra.mxu0 0.0
        %396 = vmatprep.subr.mxu0 0.0
        %397 = vmatpush2.msra.mxu0 0.0
        %398 = vmatprep.subr.mxu0 0.0
        %399 = vmatpush2.msra.mxu0 0.0
        %400 = vmatprep.subr.mxu0 0.0
        %401 = vmatpush2.msra.mxu0 0.0
        %402 = vmatprep.subr.mxu0 0.0
        %403 = vmatpush2.msra.mxu0 0.0
        %404 = vmatprep.subr.mxu0 0.0
        %405 = vmatpush2.msra.mxu0 0.0
        %406 = vmatprep.subr.mxu0 0.0
        %407 = vmatpush2.msra.mxu0 0.0
        %408 = vmatprep.subr.mxu0 0.0
        %409 = vmatpush2.msra.mxu0 0.0
        %410 = vmatprep.subr.mxu0 0.0
        %411 = vmatpush2.msra.mxu0 0.0
        %412 = vmatprep.subr.mxu0 0.0
        %413 = vmatpush2.msra.mxu0 0.0
        %414 = vmatprep.mubr.f32.mxu0 0.0
        %415 = vmatmul.mubr.f32.gmra.mxu0 %v339
        %v416 = vpop.f32.mrf.mxu0
        %v417 = vadd.f32 %v320, %v416
        %v418 = vpop.f32.mrf.mxu0
        %v419 = vadd.f32 %v320, %v418
        %420 = vmatprep.mubr.f32.mxu0 0.0
        %421 = vmatmul.mubr.f32.gmra.mxu0 %v342
        %v422 = vpop.f32.mrf.mxu0
        %v423 = vadd.f32 %v325, %v422
        %v424 = vpop.f32.mrf.mxu0
        %v425 = vadd.f32 %v325, %v424
        %426 = vmatprep.mubr.f32.mxu0 0.0
        %427 = vmatmul.mubr.f32.gmra.mxu0 %v345
        %v428 = vpop.f32.mrf.mxu0
        %v429 = vadd.f32 %v330, %v428
        %v430 = vpop.f32.mrf.mxu0
        %v431 = vadd.f32 %v330, %v430
        %432 = vmatprep.mubr.f32.mxu0 0.0
        %433 = vmatmul.mubr.f32.gmra.mxu0 %v348
        %v434 = vpop.f32.mrf.mxu0
        %v435 = vadd.f32 %v335, %v434
        %v436 = vpop.f32.mrf.mxu0
        %v437 = vadd.f32 %v335, %v436
        %438 = vdwg.mxu0
        %v439 = vmax.f32 %v417, 0.0
        %v440 = vmax.f32 %v419, 0.0
        %v441 = vmax.f32 %v423, 0.0
        %v442 = vmax.f32 %v425, 0.0
        %v443 = vmax.f32 %v429, 0.0
        %v444 = vmax.f32 %v431, 0.0
        %v445 = vmax.f32 %v435, 0.0
        %v446 = vmax.f32 %v437, 0.0
        %v447 = vld [vmem:[%s3] sm:$0xff]
        %v448 = vld [vmem:[%s3 + $0x8] sm:$0xff]
        %v449 = vld [vmem:[%s3 + $0x10] sm:$0xff]
        %v450 = vld [vmem:[%s3 + $0x18] sm:$0xff]
        %v451 = vld [vmem:[%s4] sm:$0xff]
        %v452 = vld [vmem:[%s4 + $0x8] sm:$0xff]
        %v453 = vld [vmem:[%s4 + $0x10] sm:$0xff]
        %v454 = vld [vmem:[%s4 + $0x18] sm:$0xff]
        %456 = vset.pattern.permute.xlu0 0
        %457 = vperm.xlu0 %456, %v451
        %v458 = vpop.permute.xlu0 %457
        %461 = vset.pattern.permute.xlu0 0
        %462 = vperm.xlu0 %461, %v452
        %v463 = vpop.permute.xlu0 %462
        %466 = vset.pattern.permute.xlu0 0
        %467 = vperm.xlu0 %466, %v453
        %v468 = vpop.permute.xlu0 %467
        %471 = vset.pattern.permute.xlu0 0
        %472 = vperm.xlu0 %471, %v454
        %v473 = vpop.permute.xlu0 %472
        %vm475 = vcmask 261120
        %v477 = vsel %vm475, %v447, 0
        %v480 = vsel %vm475, %v448, 0
        %v483 = vsel %vm475, %v449, 0
        %v486 = vsel %vm475, %v450, 0
        %488 = vmatprep.subr.mxu0 0.0
        %489 = vmatpush1.msra.mxu0 0.0
        %490 = vmatprep.subr.mxu0 0.0
        %491 = vmatpush1.msra.mxu0 0.0
        %492 = vmatprep.subr.mxu0 0.0
        %493 = vmatpush1.msra.mxu0 0.0
        %494 = vmatprep.subr.mxu0 0.0
        %495 = vmatpush1.msra.mxu0 0.0
        %496 = vmatprep.subr.mxu0 0.0
        %497 = vmatpush1.msra.mxu0 0.0
        %498 = vmatprep.subr.mxu0 0.0
        %499 = vmatpush1.msra.mxu0 0.0
        %500 = vmatprep.subr.mxu0 0.0
        %501 = vmatpush1.msra.mxu0 0.0
        %502 = vmatprep.subr.mxu0 0.0
        %503 = vmatpush1.msra.mxu0 0.0
        %504 = vmatprep.subr.mxu0 0.0
        %505 = vmatpush1.msra.mxu0 0.0
        %506 = vmatprep.subr.mxu0 0.0
        %507 = vmatpush1.msra.mxu0 0.0
        %508 = vmatprep.subr.mxu0 0.0
        %509 = vmatpush1.msra.mxu0 0.0
        %510 = vmatprep.subr.mxu0 0.0
        %511 = vmatpush1.msra.mxu0 0.0
        %512 = vmatprep.subr.mxu0 %v446
        %513 = vmatpush1.msra.mxu0 %v445
        %514 = vmatprep.subr.mxu0 %v444
        %515 = vmatpush1.msra.mxu0 %v443
        %516 = vmatprep.subr.mxu0 %v442
        %517 = vmatpush1.msra.mxu0 %v441
        %518 = vmatprep.subr.mxu0 %v440
        %519 = vmatpush1.msra.mxu0 %v439
        %520 = vmatprep.subr.mxu0 0.0
        %521 = vmatpush2.msra.mxu0 0.0
        %522 = vmatprep.subr.mxu0 0.0
        %523 = vmatpush2.msra.mxu0 0.0
        %524 = vmatprep.subr.mxu0 0.0
        %525 = vmatpush2.msra.mxu0 0.0
        %526 = vmatprep.subr.mxu0 0.0
        %527 = vmatpush2.msra.mxu0 0.0
        %528 = vmatprep.subr.mxu0 0.0
        %529 = vmatpush2.msra.mxu0 0.0
        %530 = vmatprep.subr.mxu0 0.0
        %531 = vmatpush2.msra.mxu0 0.0
        %532 = vmatprep.subr.mxu0 0.0
        %533 = vmatpush2.msra.mxu0 0.0
        %534 = vmatprep.subr.mxu0 0.0
        %535 = vmatpush2.msra.mxu0 0.0
        %536 = vmatprep.subr.mxu0 0.0
        %537 = vmatpush2.msra.mxu0 0.0
        %538 = vmatprep.subr.mxu0 0.0
        %539 = vmatpush2.msra.mxu0 0.0
        %540 = vmatprep.subr.mxu0 0.0
        %541 = vmatpush2.msra.mxu0 0.0
        %542 = vmatprep.subr.mxu0 0.0
        %543 = vmatpush2.msra.mxu0 0.0
        %544 = vmatprep.subr.mxu0 0.0
        %545 = vmatpush2.msra.mxu0 0.0
        %546 = vmatprep.subr.mxu0 0.0
        %547 = vmatpush2.msra.mxu0 0.0
        %548 = vmatprep.subr.mxu0 0.0
        %549 = vmatpush2.msra.mxu0 0.0
        %550 = vmatprep.subr.mxu0 0.0
        %551 = vmatpush2.msra.mxu0 0.0
        %552 = vmatprep.mubr.f32.mxu0 0.0
        %553 = vmatmul.mubr.f32.gmra.mxu0 %v477
        %v554 = vpop.f32.mrf.mxu0
        %v555 = vadd.f32 %v458, %v554
        %v556 = vpop.f32.mrf.mxu0
        %v557 = vadd.f32 %v458, %v556
        %558 = vmatprep.mubr.f32.mxu0 0.0
        %559 = vmatmul.mubr.f32.gmra.mxu0 %v480
        %v560 = vpop.f32.mrf.mxu0
        %v561 = vadd.f32 %v463, %v560
        %v562 = vpop.f32.mrf.mxu0
        %v563 = vadd.f32 %v463, %v562
        %564 = vmatprep.mubr.f32.mxu0 0.0
        %565 = vmatmul.mubr.f32.gmra.mxu0 %v483
        %v566 = vpop.f32.mrf.mxu0
        %v567 = vadd.f32 %v468, %v566
        %v568 = vpop.f32.mrf.mxu0
        %v569 = vadd.f32 %v468, %v568
        %570 = vmatprep.mubr.f32.mxu0 0.0
        %571 = vmatmul.mubr.f32.gmra.mxu0 %v486
        %v572 = vpop.f32.mrf.mxu0
        %v573 = vadd.f32 %v473, %v572
        %v574 = vpop.f32.mrf.mxu0
        %v575 = vadd.f32 %v473, %v574
        %576 = vdwg.mxu0
        %v577 = vmax.f32 %v555, 0.0
        %v578 = vmax.f32 %v557, 0.0
        %v579 = vmax.f32 %v561, 0.0
        %v580 = vmax.f32 %v563, 0.0
        %v581 = vmax.f32 %v567, 0.0
        %v582 = vmax.f32 %v569, 0.0
        %v583 = vmax.f32 %v573, 0.0
        %v584 = vmax.f32 %v575, 0.0
        %v585 = vld [vmem:[%s5] sm:$0xff]
        %v586 = vld [vmem:[%s6] sm:$0xff]
        %v588 = vsel %vm475, %v586, 0
        %590 = vmatprep.subr.mxu0 0.0
        %591 = vmatpush1.msra.mxu0 0.0
        %592 = vmatprep.subr.mxu0 0.0
        %593 = vmatpush1.msra.mxu0 0.0
        %594 = vmatprep.subr.mxu0 0.0
        %595 = vmatpush1.msra.mxu0 0.0
        %596 = vmatprep.subr.mxu0 0.0
        %597 = vmatpush1.msra.mxu0 0.0
        %598 = vmatprep.subr.mxu0 0.0
        %599 = vmatpush1.msra.mxu0 0.0
        %600 = vmatprep.subr.mxu0 0.0
        %601 = vmatpush1.msra.mxu0 0.0
        %602 = vmatprep.subr.mxu0 0.0
        %603 = vmatpush1.msra.mxu0 0.0
        %604 = vmatprep.subr.mxu0 0.0
        %605 = vmatpush1.msra.mxu0 0.0
        %606 = vmatprep.subr.mxu0 0.0
        %607 = vmatpush1.msra.mxu0 0.0
        %608 = vmatprep.subr.mxu0 0.0
        %609 = vmatpush1.msra.mxu0 0.0
        %610 = vmatprep.subr.mxu0 0.0
        %611 = vmatpush1.msra.mxu0 0.0
        %612 = vmatprep.subr.mxu0 0.0
        %613 = vmatpush1.msra.mxu0 0.0
        %614 = vmatprep.subr.mxu0 %v584
        %615 = vmatpush1.msra.mxu0 %v583
        %616 = vmatprep.subr.mxu0 %v582
        %617 = vmatpush1.msra.mxu0 %v581
        %618 = vmatprep.subr.mxu0 %v580
        %619 = vmatpush1.msra.mxu0 %v579
        %620 = vmatprep.subr.mxu0 %v578
        %621 = vmatpush1.msra.mxu0 %v577
        %622 = vmatprep.subr.mxu0 0.0
        %623 = vmatpush2.msra.mxu0 0.0
        %624 = vmatprep.subr.mxu0 0.0
        %625 = vmatpush2.msra.mxu0 0.0
        %626 = vmatprep.subr.mxu0 0.0
        %627 = vmatpush2.msra.mxu0 0.0
        %628 = vmatprep.subr.mxu0 0.0
        %629 = vmatpush2.msra.mxu0 0.0
        %630 = vmatprep.subr.mxu0 0.0
        %631 = vmatpush2.msra.mxu0 0.0
        %632 = vmatprep.subr.mxu0 0.0
        %633 = vmatpush2.msra.mxu0 0.0
        %634 = vmatprep.subr.mxu0 0.0
        %635 = vmatpush2.msra.mxu0 0.0
        %636 = vmatprep.subr.mxu0 0.0
        %637 = vmatpush2.msra.mxu0 0.0
        %638 = vmatprep.subr.mxu0 0.0
        %639 = vmatpush2.msra.mxu0 0.0
        %640 = vmatprep.subr.mxu0 0.0
        %641 = vmatpush2.msra.mxu0 0.0
        %642 = vmatprep.subr.mxu0 0.0
        %643 = vmatpush2.msra.mxu0 0.0
        %644 = vmatprep.subr.mxu0 0.0
        %645 = vmatpush2.msra.mxu0 0.0
        %646 = vmatprep.subr.mxu0 0.0
        %647 = vmatpush2.msra.mxu0 0.0
        %648 = vmatprep.subr.mxu0 0.0
        %649 = vmatpush2.msra.mxu0 0.0
        %650 = vmatprep.subr.mxu0 0.0
        %651 = vmatpush2.msra.mxu0 0.0
        %652 = vmatprep.subr.mxu0 0.0
        %653 = vmatpush2.msra.mxu0 0.0
        %654 = vmatprep.mubr.f32.mxu0 0.0
        %655 = vmatmul.mubr.f32.gmra.mxu0 %v588
        %v656 = vpop.f32.mrf.mxu0
        %v657 = vadd.f32 0.0, %v656
        %v658 = vpop.f32.mrf.mxu0
        %v659 = vadd.f32 0.0, %v658
        %660 = vdwg.mxu0
        %v662 = vsel %vm337, %v585, 0
        %664 = vmatprep.subr.mxu0 0.0
        %665 = vmatpush1.msra.mxu0 0.0
        %666 = vmatprep.subr.mxu0 0.0
        %667 = vmatpush1.msra.mxu0 0.0
        %668 = vmatprep.subr.mxu0 0.0
        %669 = vmatpush1.msra.mxu0 0.0
        %670 = vmatprep.subr.mxu0 0.0
        %671 = vmatpush1.msra.mxu0 0.0
        %672 = vmatprep.subr.mxu0 0.0
        %673 = vmatpush1.msra.mxu0 0.0
        %674 = vmatprep.subr.mxu0 0.0
        %675 = vmatpush1.msra.mxu0 0.0
        %676 = vmatprep.subr.mxu0 0.0
        %677 = vmatpush1.msra.mxu0 0.0
        %678 = vmatprep.subr.mxu0 0.0
        %679 = vmatpush1.msra.mxu0 0.0
        %680 = vmatprep.subr.mxu0 0.0
        %681 = vmatpush1.msra.mxu0 0.0
        %682 = vmatprep.subr.mxu0 0.0
        %683 = vmatpush1.msra.mxu0 0.0
        %684 = vmatprep.subr.mxu0 0.0
        %685 = vmatpush1.msra.mxu0 0.0
        %686 = vmatprep.subr.mxu0 0.0
        %687 = vmatpush1.msra.mxu0 0.0
        %688 = vmatprep.subr.mxu0 0.0
        %689 = vmatpush1.msra.mxu0 0.0
        %690 = vmatprep.subr.mxu0 0.0
        %691 = vmatpush1.msra.mxu0 0.0
        %692 = vmatprep.subr.mxu0 0.0
        %693 = vmatpush1.msra.mxu0 0.0
        %694 = vmatprep.subr.mxu0 %v308
        %695 = vmatpush1.msra.mxu0 %v307
        %696 = vmatprep.subr.mxu0 0.0
        %697 = vmatpush2.msra.mxu0 0.0
        %698 = vmatprep.subr.mxu0 0.0
        %699 = vmatpush2.msra.mxu0 0.0
        %700 = vmatprep.subr.mxu0 0.0
        %701 = vmatpush2.msra.mxu0 0.0
        %702 = vmatprep.subr.mxu0 0.0
        %703 = vmatpush2.msra.mxu0 0.0
        %704 = vmatprep.subr.mxu0 0.0
        %705 = vmatpush2.msra.mxu0 0.0
        %706 = vmatprep.subr.mxu0 0.0
        %707 = vmatpush2.msra.mxu0 0.0
        %708 = vmatprep.subr.mxu0 0.0
        %709 = vmatpush2.msra.mxu0 0.0
        %710 = vmatprep.subr.mxu0 0.0
        %711 = vmatpush2.msra.mxu0 0.0
        %712 = vmatprep.subr.mxu0 0.0
        %713 = vmatpush2.msra.mxu0 0.0
        %714 = vmatprep.subr.mxu0 0.0
        %715 = vmatpush2.msra.mxu0 0.0
        %716 = vmatprep.subr.mxu0 0.0
        %717 = vmatpush2.msra.mxu0 0.0
        %718 = vmatprep.subr.mxu0 0.0
        %719 = vmatpush2.msra.mxu0 0.0
        %720 = vmatprep.subr.mxu0 0.0
        %721 = vmatpush2.msra.mxu0 0.0
        %722 = vmatprep.subr.mxu0 0.0
        %723 = vmatpush2.msra.mxu0 0.0
        %724 = vmatprep.subr.mxu0 0.0
        %725 = vmatpush2.msra.mxu0 0.0
        %726 = vmatprep.subr.mxu0 0.0
        %727 = vmatpush2.msra.mxu0 0.0
        %728 = vmatprep.mubr.f32.mxu0 0.0
        %729 = vmatmul.mubr.f32.gmra.mxu0 %v662
        %v730 = vpop.f32.mrf.mxu0
        %v731 = vadd.f32 %v657, %v730
        %v732 = vpop.f32.mrf.mxu0
        %v733 = vadd.f32 %v659, %v732
        %734 = vdwg.mxu0
        %v735 = vld [vmem:[%s7] sm:$0xff]
        %737 = vset.pattern.permute.xlu0 0
        %738 = vperm.xlu0 %737, %v735
        %v739 = vpop.permute.xlu0 %738
        %v741 = vadd.f32 %v731, %v739
        %v742 = vadd.f32 %v733, %v739
        %v743 = vmax.f32 %v741, 0.0
        %v744 = vmax.f32 %v742, 0.0
        %v745 = vand.u32 2147483647, %v741
        %v746 = vand.u32 2147483647, %v742
        %v747 = vsub.f32 0.0, %v745
        %v748 = vsub.f32 0.0, %v746
        %v749 = vmul.f32 %v747, 1.442695
        %v750 = vpow.pop %v749
        %v751 = vmul.f32 %v748, 1.442695
        %v752 = vpow.pop %v751
        %v753 = vadd.f32 %v750, 1.0
        %v754 = vlog2.pop %v753
        %v755 = vmul.f32 %v754, 0.6931472
        %v756 = vmul.f32 -0.5, %v750
        %v757 = vadd.f32 %v756, 1.0
        %v758 = vmul.f32 %v757, %v750
        %v759 = vand.u32 2147483647, %v750
        %vm760 = vcmp.lt.f32.partialorder %v759, 0.0004427343
        %v761 = vsel %vm760, %v758, %v755
        %v762 = vadd.f32 %v752, 1.0
        %v763 = vlog2.pop %v762
        %v764 = vmul.f32 %v763, 0.6931472
        %v765 = vmul.f32 -0.5, %v752
        %v766 = vadd.f32 %v765, 1.0
        %v767 = vmul.f32 %v766, %v752
        %v768 = vand.u32 2147483647, %v752
        %vm769 = vcmp.lt.f32.partialorder %v768, 0.0004427343
        %v770 = vsel %vm769, %v767, %v764
        %v771 = vadd.f32 %v743, %v761
        %v772 = vadd.f32 %v744, %v770
        %v773 = vlaneseq
        %v774 = vshrl.u32 %v773, 7
        %vm775 = vcmp.lt.s32.totalorder %v774, 4
        %v776 = vsel %vm775, %v741, %v771
        %v777 = vsel %vm775, %v742, %v772
        %778 = vst [vmem:[%s299] sm:$0xff] %v776
        %779 = vst [vmem:[%s299 + $0x8] sm:$0xff] %v777
        %s780 = sand.u32 %s203, 1
        %s781 = scalar_lea.sflag [#allocation3], %s780
        %s782 = sand.u32 %s203, 1
        %s783 = smul.addr %s782, 16
        %s784 = scalar_lea.vmem [#allocation2], %s783
        // Predicated region
        $region53: #{tpu_custom_call.1} parent=51 // pred_check
          %p785 = pneg %p213
        $region54: #{tpu_custom_call.1} parent=51 // pred_check_branch
          %787 = sbr.rel (%p785) target = $region56
        $region55: #{tpu_custom_call.1} parent=51 // pred_region
          %s788 = smul.u32 2, %s22
          %s790 = ssub.s32 256, 256
          %791 = vsyncadd %s781, %s790
          %s792 = smul.addr %s788, 128
          %s793 = scalar_lea.hbm %s8, %s792
          %s795 = sshll.u32 %s784, 4
          %s796 = int_to_ptr.vmem [resolvable:$true] %s795
          %798 = dma.vmem_to_hbm [thread:$0]  %s796, 256, %s793, %s781
        $region56: #{tpu_custom_call.1} parent=51 // pred_fallthru
          _
      $region52: #{tpu_custom_call.1} parent=5 // pred_fallthru
        _
      %p799 = scmp.le.s32.totalorder 2, %s17
      // Predicated region
      $region57: #{tpu_custom_call.1} parent=5 // pred_check
        %p800 = pneg %p799
      $region58: #{tpu_custom_call.1} parent=5 // pred_check_branch
        %802 = sbr.rel (%p800) target = $region60
      $region59: #{tpu_custom_call.1} parent=5 // pred_region
        %s803 = ssub.s32 %s17, 2
        // Predicated region
        $region61: #{tpu_custom_call.1} parent=59 // pred_check
          %p804 = pneg %p219
        $region62: #{tpu_custom_call.1} parent=59 // pred_check_branch
          %806 = sbr.rel (%p804) target = $region64
        $region63: #{tpu_custom_call.1} parent=59 // pred_region
          %s807 = sand.u32 %s204, 1
          %s808 = scalar_lea.sflag [#allocation3], %s807
          %s809 = sand.u32 %s204, 1
          %s810 = smul.addr %s809, 16
          %s811 = scalar_lea.vmem [#allocation2], %s810
          %812 = dma.done %s808, 256
        $region64: #{tpu_custom_call.1} parent=59 // pred_fallthru
          _
      $region60: #{tpu_custom_call.1} parent=5 // pred_fallthru
        _
    $region6: #{tpu_custom_call.1} parent=1 // loop_footer
      %s21 = sadd.s32 1, %s17
    $region7: #{tpu_custom_call.1} parent=1 // loop_footer_branch
      %16 = sbr.rel target = $region3
    $region8: #{tpu_custom_call.1} parent=1 // loop_exit
      _
    %813 = vsyncpa [#allocation3], 1
    %s814 = scalar_lea.sflag [#allocation3], 1
    %815 = vsyncpa %s814, 1

</llo_original>
